<compile_context>
chip_gen: v5e
topology: v5e:2x2
jax: 0.10.0
libtpu: 0.0.40
codegen_flags: <defaults>
</compile_context>

<pallas_src>
import functools

import jax
import jax.numpy as jnp
from jax.experimental import pallas as pl
from jax.experimental.pallas import tpu as pltpu

IN_PLANES = 512          # resnet18/34 configuration of Baseline
NUM_CLASSES = 16
NC_PAD = 128             # lane-dense classifier output columns
CIN_PAD = 8              # stem input channels zero-padded to one sublane group
BT_MAX = 16              # max batch elements per grid step
EPS = 1e-5


# ---------------------------------------------------------------------------
# Kernel bodies
# ---------------------------------------------------------------------------
def _stem_and_pool(x_ref, w_ref, b_ref, *, bt, hw):
    """MXU stem + ReLU + global avg/max pool for Bt batch elements.

    x_ref block: (1, Bt*HW, CIN_PAD); w: (CIN_PAD, C); b: (1, C).
    Returns (gap, gmp, gsum), each (Bt, C) with C on the lane axis.
    """
    x = x_ref[0]                                            # (Bt*HW, CIN_PAD)
    fmap = jnp.dot(x, w_ref[...], preferred_element_type=jnp.float32)
    fmap = jnp.maximum(fmap + b_ref[...], 0.0)              # (Bt*HW, C)
    fmap = fmap.reshape(bt, hw, fmap.shape[-1])             # layout-free split
    gap = jnp.mean(fmap, axis=1)                            # (Bt, C)
    gmp = jnp.max(fmap, axis=1)                             # (Bt, C)
    return gap, gmp, gap + gmp


def _make_eval_kernel(bt, hw, apply_bn):
    """Eval forward: only gsum (and optionally its BN affine) is needed."""
    def kernel(x_ref, w_ref, b_ref, scale_ref, shift_ref, out_ref):
        _, _, gsum = _stem_and_pool(x_ref, w_ref, b_ref, bt=bt, hw=hw)
        if apply_bn:      # static: feat3 = BN1d_eval(gap + gmp)
            out_ref[0] = gsum * scale_ref[...] + shift_ref[...]
        else:             # neck == 'no' or neck_feat == 'before'
            out_ref[0] = gsum
    return kernel


def _make_train_kernel(bt, hw):
    """Training forward: three bnneck applications fused into one matmul."""
    def kernel(x_ref, w_ref, b_ref, scale_ref, shift_ref, wcls_ref,
               feats_ref, scores_ref):
        gap, gmp, gsum = _stem_and_pool(x_ref, w_ref, b_ref, bt=bt, hw=hw)
        feats = jnp.concatenate([gap, gmp, gsum], axis=0)   # (3*Bt, C)
        feats_ref[0] = feats                                 # raw pooled feats
        bn = feats * scale_ref[...] + shift_ref[...]         # folded BN affine
        # Single (3*Bt, C) @ (C, 128) MXU matmul; classifier cols lane-dense.
        scores_ref[0] = jnp.dot(bn, wcls_ref[...],
                                preferred_element_type=jnp.float32)
    return kernel


# ---------------------------------------------------------------------------
# pallas_call wrappers
# ---------------------------------------------------------------------------
def _batch_tiling(b):
    """(grid_steps, batch_per_step). >=2 steps when possible for v7x's 2 TCs."""
    if b <= 1:
        return 1, 1
    grid = max(2, -(-b // BT_MAX))
    bt = -(-b // grid)
    grid = -(-b // bt)
    return grid, bt


def _fused_eval(x3d, w_stem, b_stem, scale, shift, apply_bn, bt, hw):
    grid_b, bthw, cin_p = x3d.shape
    c = w_stem.shape[1]
    vec = pl.BlockSpec((1, c), lambda g: (0, 0))
    out = pl.pallas_call(
        _make_eval_kernel(bt, hw, apply_bn),
        out_shape=jax.ShapeDtypeStruct((grid_b, bt, c), jnp.float32),
        grid=(grid_b,),
        in_specs=[
            pl.BlockSpec((1, bthw, cin_p), lambda g: (g, 0, 0)),
            pl.BlockSpec((cin_p, c), lambda g: (0, 0)),
            vec, vec, vec,
        ],
        out_specs=pl.BlockSpec((1, bt, c), lambda g: (g, 0, 0)),
        compiler_params=pltpu.CompilerParams(
            dimension_semantics=("parallel",)),
    )(x3d, w_stem, b_stem, scale, shift)
    return out.reshape(grid_b * bt, c)


def _fused_train(x3d, w_stem, b_stem, scale, shift, w_cls_pad, bt, hw):
    grid_b, bthw, cin_p = x3d.shape
    c = w_stem.shape[1]
    ncp = w_cls_pad.shape[1]
    vec = pl.BlockSpec((1, c), lambda g: (0, 0))
    feats, scores = pl.pallas_call(
        _make_train_kernel(bt, hw),
        out_shape=(jax.ShapeDtypeStruct((grid_b, 3 * bt, c), jnp.float32),
                   jax.ShapeDtypeStruct((grid_b, 3 * bt, ncp), jnp.float32)),
        grid=(grid_b,),
        in_specs=[
            pl.BlockSpec((1, bthw, cin_p), lambda g: (g, 0, 0)),
            pl.BlockSpec((cin_p, c), lambda g: (0, 0)),
            vec, vec, vec,
            pl.BlockSpec((c, ncp), lambda g: (0, 0)),
        ],
        out_specs=(pl.BlockSpec((1, 3 * bt, c), lambda g: (g, 0, 0)),
                   pl.BlockSpec((1, 3 * bt, ncp), lambda g: (g, 0, 0))),
        compiler_params=pltpu.CompilerParams(
            dimension_semantics=("parallel",)),
    )(x3d, w_stem, b_stem, scale, shift, w_cls_pad)
    return feats, scores


# ---------------------------------------------------------------------------
# Parameters & forward
# ---------------------------------------------------------------------------
def init_params(key):
    ks = jax.random.split(key, 7)
    w_stem = jax.random.normal(ks[0], (3, IN_PLANES), jnp.float32) * 0.05
    # PyTorch nn.Linear weight is (num_classes, in_planes); stored here
    # pre-transposed + lane-padded as (in_planes, NC_PAD) for the kernel.
    w_cls = jax.random.normal(ks[6], (IN_PLANES, NUM_CLASSES), jnp.float32) * 0.02
    return dict(
        # Stem weight zero-padded along Cin (3 -> CIN_PAD) once at init.
        w_stem=jnp.pad(w_stem, ((0, CIN_PAD - 3), (0, 0))),
        b_stem=jax.random.normal(ks[1], (1, IN_PLANES), jnp.float32) * 0.01,
        bn_gamma=jax.random.uniform(ks[2], (1, IN_PLANES), jnp.float32,
                                    minval=0.5, maxval=1.5),
        bn_beta=jax.random.normal(ks[3], (1, IN_PLANES), jnp.float32) * 0.1,
        bn_mean=jax.random.normal(ks[4], (1, IN_PLANES), jnp.float32) * 0.1,
        bn_var=jax.random.uniform(ks[5], (1, IN_PLANES), jnp.float32,
                                  minval=0.5, maxval=1.5),
        w_cls_pad=jnp.pad(w_cls, ((0, 0), (0, NC_PAD - NUM_CLASSES))),
    )


@functools.partial(jax.jit, static_argnames=("training", "neck", "neck_feat"))
def baseline_forward(x_nchw, params, training=False, neck="bnneck",
                     neck_feat="after"):
    B, cin, H, W = x_nchw.shape
    hw = H * W
    grid_b, bt = _batch_tiling(B)
    b_pad = grid_b * bt

    # NCHW -> (B, HW, Cin) channels-last, pad batch to grid_b*bt and Cin to 8,
    # then group Bt elements per grid block: (grid_b, Bt*HW, CIN_PAD).
    x = jnp.transpose(x_nchw, (0, 2, 3, 1)).reshape(B, hw, cin)
    x = jnp.pad(x, ((0, b_pad - B), (0, 0), (0, CIN_PAD - cin)))
    x = x.reshape(grid_b, bt * hw, CIN_PAD)

    # Eval-mode BatchNorm folded into one affine: y = x * scale + shift.
    scale = params["bn_gamma"] * jax.lax.rsqrt(params["bn_var"] + EPS)
    shift = params["bn_beta"] - params["bn_mean"] * scale

    if not training:
        # neck_feat == 'after' -> feat3 = BN(gap + gmp); otherwise the raw
        # gap + gmp. No classifier matmul on the inference path.
        apply_bn = (neck == "bnneck") and (neck_feat == "after")
        out = _fused_eval(x, params["w_stem"], params["b_stem"],
                          scale, shift, apply_bn, bt, hw)
        return out[:B]

    # Training (neck == 'bnneck'): one fused kernel produces gap/gmp/gsum and
    # the three classifier scores.
    # TODO(synk): PyTorch BatchNorm1d in train mode uses batch statistics;
    # here the running-stat (eval) affine is used for the scores.
    feats, scores = _fused_train(x, params["w_stem"], params["b_stem"],
                                 scale, shift, params["w_cls_pad"], bt, hw)
    c = feats.shape[-1]
    feats = feats.reshape(grid_b, 3, bt, c)
    scores = scores.reshape(grid_b, 3, bt, NC_PAD)
    gap = feats[:, 0].reshape(b_pad, c)[:B]
    gmp = feats[:, 1].reshape(b_pad, c)[:B]
    gsum = feats[:, 2].reshape(b_pad, c)[:B]
    s1 = scores[:, 0].reshape(b_pad, NC_PAD)[:B, :NUM_CLASSES]
    s2 = scores[:, 1].reshape(b_pad, NC_PAD)[:B, :NUM_CLASSES]
    s3 = scores[:, 2].reshape(b_pad, NC_PAD)[:B, :NUM_CLASSES]
    return (s1, gap, s2, gmp, s3, gsum)


if __name__ == "__main__":
    key = jax.random.PRNGKey(0)
    pkey, xkey = jax.random.split(key)
    params = init_params(pkey)

    # Small NCHW image batch (B=2, C=3, H=W=8).
    x = jax.random.normal(xkey, (2, 3, 8, 8), jnp.float32)

    # Eval path (hot inference path): feat3 = BN(gap + gmp).
    feat = baseline_forward(x, params, training=False,
                            neck="bnneck", neck_feat="after")
    feat = jax.block_until_ready(feat)
    assert feat.shape == (2, IN_PLANES) and feat.dtype == jnp.float32

    # Eval with neck_feat='before': raw gap + gmp.
    feat_b = baseline_forward(x, params, training=False,
                              neck="bnneck", neck_feat="before")
    feat_b = jax.block_until_ready(feat_b)
    assert feat_b.shape == (2, IN_PLANES)

    # Training path: (s1, gap, s2, gmp, s3, gsum).
    outs = baseline_forward(x, params, training=True,
                            neck="bnneck", neck_feat="after")
    outs = jax.block_until_ready(outs)
    s1, gap, s2, gmp, s3, gsum = outs
    assert s1.shape == (2, NUM_CLASSES) and s3.shape == (2, NUM_CLASSES)
    assert gap.shape == (2, IN_PLANES) and gsum.shape == (2, IN_PLANES)

    print("KERNEL_OK")
</pallas_src>

<mosaic_0001>
module attributes {stable_mosaic.version = 11 : i64} {
  func.func @kernel(%arg0: i32, %arg1: memref<1x64x8xf32, #tpu.memory_space<vmem>>, %arg2: memref<8x512xf32, #tpu.memory_space<vmem>>, %arg3: memref<1x512xf32, #tpu.memory_space<vmem>>, %arg4: memref<1x512xf32, #tpu.memory_space<vmem>>, %arg5: memref<1x512xf32, #tpu.memory_space<vmem>>, %arg6: memref<1x1x512xf32, #tpu.memory_space<vmem>>) attributes {dimension_semantics = [#tpu.dimension_semantics<parallel>], iteration_bounds = array<i64: 2>, scalar_prefetch = 0 : i64, scratch_operands = 0 : i64, tpu.core_type = #tpu.core_type<tc>, window_params = [{transform_indices = @transform_0, window_bounds = array<i64: 1, 64, 8>}, {pipeline_mode = #tpu.pipeline_mode<synchronous>, transform_indices = @transform_1, window_bounds = array<i64: 8, 512>}, {pipeline_mode = #tpu.pipeline_mode<synchronous>, transform_indices = @transform_2, window_bounds = array<i64: 1, 512>}, {pipeline_mode = #tpu.pipeline_mode<synchronous>, transform_indices = @transform_3, window_bounds = array<i64: 1, 512>}, {pipeline_mode = #tpu.pipeline_mode<synchronous>, transform_indices = @transform_4, window_bounds = array<i64: 1, 512>}, {transform_indices = @transform_5, window_bounds = array<i64: 1, 1, 512>}]} {
    %c0 = arith.constant 0 : index
    %c0_0 = arith.constant 0 : index
    %c0_1 = arith.constant 0 : index
    %0 = vector.load %arg1[%c0, %c0_0, %c0_1] : memref<1x64x8xf32, #tpu.memory_space<vmem>>, vector<1x64x8xf32>
    %1 = vector.shape_cast %0 : vector<1x64x8xf32> to vector<64x8xf32>
    %c0_2 = arith.constant 0 : index
    %c0_3 = arith.constant 0 : index
    %2 = vector.load %arg2[%c0_2, %c0_3] : memref<8x512xf32, #tpu.memory_space<vmem>>, vector<8x512xf32>
    %cst = arith.constant dense<0.000000e+00> : vector<64x512xf32>
    %3 = tpu.matmul %1, %2, %cst {dimension_numbers = #tpu.dot_dimension_numbers<[1], [0], [0], [1], [0, 0, 1, 1], [], []>} : vector<64x8xf32>, vector<8x512xf32>, vector<64x512xf32> -> vector<64x512xf32>
    %c0_4 = arith.constant 0 : index
    %c0_5 = arith.constant 0 : index
    %4 = vector.load %arg3[%c0_4, %c0_5] : memref<1x512xf32, #tpu.memory_space<vmem>>, vector<1x512xf32>
    %5 = vector.broadcast %4 : vector<1x512xf32> to vector<64x512xf32>
    %6 = arith.addf %3, %5 : vector<64x512xf32>
    %cst_6 = arith.constant 0.000000e+00 : f32
    %7 = vector.broadcast %cst_6 : f32 to vector<64x512xf32>
    %8 = arith.maximumf %6, %7 : vector<64x512xf32>
    %9 = vector.shape_cast %8 : vector<64x512xf32> to vector<1x64x512xf32>
    %cst_7 = arith.constant dense<0.000000e+00> : vector<1x512xf32>
    %10 = vector.multi_reduction <add>, %9, %cst_7 [1] : vector<1x64x512xf32> to vector<1x512xf32>
    %cst_8 = arith.constant 6.400000e+01 : f32
    %11 = vector.broadcast %cst_8 : f32 to vector<1x512xf32>
    %12 = arith.divf %10, %11 : vector<1x512xf32>
    %cst_9 = arith.constant dense<0xFF800000> : vector<1x512xf32>
    %13 = vector.multi_reduction <maximumf>, %9, %cst_9 [1] : vector<1x64x512xf32> to vector<1x512xf32>
    %14 = arith.addf %12, %13 : vector<1x512xf32>
    %c0_10 = arith.constant 0 : index
    %c0_11 = arith.constant 0 : index
    %15 = vector.load %arg4[%c0_10, %c0_11] : memref<1x512xf32, #tpu.memory_space<vmem>>, vector<1x512xf32>
    %16 = arith.mulf %14, %15 : vector<1x512xf32>
    %c0_12 = arith.constant 0 : index
    %c0_13 = arith.constant 0 : index
    %17 = vector.load %arg5[%c0_12, %c0_13] : memref<1x512xf32, #tpu.memory_space<vmem>>, vector<1x512xf32>
    %18 = arith.addf %16, %17 : vector<1x512xf32>
    %c0_14 = arith.constant 0 : index
    %c0_15 = arith.constant 0 : index
    %c0_16 = arith.constant 0 : index
    %19 = vector.load %arg6[%c0_14, %c0_15, %c0_16] : memref<1x1x512xf32, #tpu.memory_space<vmem>>, vector<1x1x512xf32>
    %20 = vector.shape_cast %19 : vector<1x1x512xf32> to vector<1x512xf32>
    %21 = vector.shape_cast %18 : vector<1x512xf32> to vector<1x1x512xf32>
    tpu.vector_store %arg6[%c0_14, %c0_15, %c0_16], %21 {strides = array<i32>} : memref<1x1x512xf32, #tpu.memory_space<vmem>>, vector<1x1x512xf32>,
    return
  }
  func.func @transform_0(%arg0: i32) -> (i32, i32, i32) {
    %c0_i32 = arith.constant 0 : i32
    %c0_i32_0 = arith.constant 0 : i32
    %c0_i32_1 = arith.constant 0 : i32
    return %arg0, %c0_i32, %c0_i32_0 : i32, i32, i32
  }
  func.func @transform_1(%arg0: i32) -> (i32, i32) {
    %c0_i32 = arith.constant 0 : i32
    %c0_i32_0 = arith.constant 0 : i32
    %c0_i32_1 = arith.constant 0 : i32
    return %c0_i32, %c0_i32_0 : i32, i32
  }
  func.func @transform_2(%arg0: i32) -> (i32, i32) {
    %c0_i32 = arith.constant 0 : i32
    %c0_i32_0 = arith.constant 0 : i32
    %c0_i32_1 = arith.constant 0 : i32
    return %c0_i32, %c0_i32_0 : i32, i32
  }
  func.func @transform_3(%arg0: i32) -> (i32, i32) {
    %c0_i32 = arith.constant 0 : i32
    %c0_i32_0 = arith.constant 0 : i32
    %c0_i32_1 = arith.constant 0 : i32
    return %c0_i32, %c0_i32_0 : i32, i32
  }
  func.func @transform_4(%arg0: i32) -> (i32, i32) {
    %c0_i32 = arith.constant 0 : i32
    %c0_i32_0 = arith.constant 0 : i32
    %c0_i32_1 = arith.constant 0 : i32
    return %c0_i32, %c0_i32_0 : i32, i32
  }
  func.func @transform_5(%arg0: i32) -> (i32, i32, i32) {
    %c0_i32 = arith.constant 0 : i32
    %c0_i32_0 = arith.constant 0 : i32
    %c0_i32_1 = arith.constant 0 : i32
    return %arg0, %c0_i32, %c0_i32_0 : i32, i32, i32
  }
}

</mosaic_0001>

<llo_original>
// kernel: baseline_forward.1
$region0: #{baseline_forward.1}
  #allocation0 [shape = 'u32[]', space=smem, size = 0x4, offset = 0x4, fixed_abs, tag = 'smem constant byte address 0x4 - core index']
  #allocation1 [shape = 'u32[72,128]{1,0:T(1,128)}', space=vmem, size = 0x9000, scoped, tag = 'internal scratch']
  %s0 = inlined_call_operand.vmem [shape: f32[2,64,8], index: 0, kind: input, shape index: {}]
  %s1 = inlined_call_operand.vmem [shape: f32[8,512], index: 1, kind: input, shape index: {}]
  %s2 = inlined_call_operand.vmem [shape: f32[1,512], index: 2, kind: input, shape index: {}]
  %s3 = inlined_call_operand.vmem [shape: f32[1,512], index: 3, kind: input, shape index: {}]
  %s4 = inlined_call_operand.vmem [shape: f32[1,512], index: 4, kind: input, shape index: {}]
  %s5 = inlined_call_operand.vmem [shape: f32[2,1,512], index: 5, kind: output, shape index: {}]
  %s6 = sld [smem:[#allocation0]]
  $region53: #{baseline_forward.1} parent=0
    _
  %s8 = ssub.s32 1, %s6
  %s9 = scalar_select 0, %s8, %s6
  loop: start=0, step=1, limit=4
  $region2: #{baseline_forward.1} parent=0 // loop_pre_header
    _
  $region3: #{baseline_forward.1} parent=0 // loop_header
    %s11 = sphi 0, %s15
    %p12 = scmp.ge.s32.totalorder %s11, 4
    %s21 = sphi 0, %s23
    %s24 = sphi 0, %s21
    %s25 = sphi 0, %s24
    %s41 = sphi 0, %s25
    %s45 = sphi 0, %s45
    %s47 = sphi 0, %s45
    %s48 = sphi 0, %s47
    %s62 = sphi 0, %s48
    %s66 = sphi 0, %s66
    %s68 = sphi 0, %s66
    %s69 = sphi 0, %s68
    %s83 = sphi 0, %s69
    %s87 = sphi 0, %s87
    %s89 = sphi 0, %s87
    %s90 = sphi 0, %s89
    %s104 = sphi 0, %s90
    %s108 = sphi 0, %s108
    %s110 = sphi 0, %s108
    %s111 = sphi 0, %s110
    %s125 = sphi 0, %s111
    %s131 = sphi 0, %s133
    %s134 = sphi 0, %s131
    %s135 = sphi 0, %s134
    %s151 = sphi 0, %s135
  $region4: #{baseline_forward.1} parent=0 // loop_header_branch
    %14 = sbr.rel (%p12) target = $region8
  $region5: #{baseline_forward.1} parent=0 // loop_body
    %s16 = ssub.s32 %s11, 1
    %s17 = ssub.s32 %s11, 2
    %s18 = sadd.s32 %s11, 1
    %s19 = ssub.s32 %s11, %s18
    %p20 = scmp.eq.s32.totalorder %s19, 0
    %s22 = sadd.s32 %s21, 1
    %s23 = scalar_select %p20, %s21, %s22
    %p26 = pneg %p20
    %p27 = scmp.eq.s32.totalorder %s11, 1
    %p28 = por %p26, %p27
    %p29 = scmp.ne.s32.totalorder %s21, %s24
    %p30 = scmp.eq.s32.totalorder %s11, 0
    %p31 = por %p29, %p30
    %p32 = scmp.ne.s32.totalorder %s21, %s24
    %p33 = scmp.eq.s32.totalorder %s16, 1
    %p34 = por %p32, %p33
    %p35 = scmp.ne.s32.totalorder %s24, %s25
    %p36 = scmp.eq.s32.totalorder %s16, 0
    %p37 = por %p35, %p36
    %p38 = scmp.ne.s32.totalorder %s24, %s25
    %p39 = scmp.eq.s32.totalorder %s17, 1
    %p40 = por %p38, %p39
    %p42 = scmp.ne.s32.totalorder %s25, %s41
    %p43 = scmp.eq.s32.totalorder %s17, 0
    %p44 = por %p42, %p43
    %s46 = sadd.s32 %s45, 1
    %p49 = scmp.eq.s32.totalorder %s11, 1
    %p50 = scmp.ne.s32.totalorder %s45, %s47
    %p51 = scmp.eq.s32.totalorder %s11, 0
    %p52 = por %p50, %p51
    %p53 = scmp.ne.s32.totalorder %s45, %s47
    %p54 = scmp.eq.s32.totalorder %s16, 1
    %p55 = por %p53, %p54
    %p56 = scmp.ne.s32.totalorder %s47, %s48
    %p57 = scmp.eq.s32.totalorder %s16, 0
    %p58 = por %p56, %p57
    %p59 = scmp.ne.s32.totalorder %s47, %s48
    %p60 = scmp.eq.s32.totalorder %s17, 1
    %p61 = por %p59, %p60
    %p63 = scmp.ne.s32.totalorder %s48, %s62
    %p64 = scmp.eq.s32.totalorder %s17, 0
    %p65 = por %p63, %p64
    %s67 = sadd.s32 %s66, 1
    %p70 = scmp.eq.s32.totalorder %s11, 1
    %p71 = scmp.ne.s32.totalorder %s66, %s68
    %p72 = scmp.eq.s32.totalorder %s11, 0
    %p73 = por %p71, %p72
    %p74 = scmp.ne.s32.totalorder %s66, %s68
    %p75 = scmp.eq.s32.totalorder %s16, 1
    %p76 = por %p74, %p75
    %p77 = scmp.ne.s32.totalorder %s68, %s69
    %p78 = scmp.eq.s32.totalorder %s16, 0
    %p79 = por %p77, %p78
    %p80 = scmp.ne.s32.totalorder %s68, %s69
    %p81 = scmp.eq.s32.totalorder %s17, 1
    %p82 = por %p80, %p81
    %p84 = scmp.ne.s32.totalorder %s69, %s83
    %p85 = scmp.eq.s32.totalorder %s17, 0
    %p86 = por %p84, %p85
    %s88 = sadd.s32 %s87, 1
    %p91 = scmp.eq.s32.totalorder %s11, 1
    %p92 = scmp.ne.s32.totalorder %s87, %s89
    %p93 = scmp.eq.s32.totalorder %s11, 0
    %p94 = por %p92, %p93
    %p95 = scmp.ne.s32.totalorder %s87, %s89
    %p96 = scmp.eq.s32.totalorder %s16, 1
    %p97 = por %p95, %p96
    %p98 = scmp.ne.s32.totalorder %s89, %s90
    %p99 = scmp.eq.s32.totalorder %s16, 0
    %p100 = por %p98, %p99
    %p101 = scmp.ne.s32.totalorder %s89, %s90
    %p102 = scmp.eq.s32.totalorder %s17, 1
    %p103 = por %p101, %p102
    %p105 = scmp.ne.s32.totalorder %s90, %s104
    %p106 = scmp.eq.s32.totalorder %s17, 0
    %p107 = por %p105, %p106
    %s109 = sadd.s32 %s108, 1
    %p112 = scmp.eq.s32.totalorder %s11, 1
    %p113 = scmp.ne.s32.totalorder %s108, %s110
    %p114 = scmp.eq.s32.totalorder %s11, 0
    %p115 = por %p113, %p114
    %p116 = scmp.ne.s32.totalorder %s108, %s110
    %p117 = scmp.eq.s32.totalorder %s16, 1
    %p118 = por %p116, %p117
    %p119 = scmp.ne.s32.totalorder %s110, %s111
    %p120 = scmp.eq.s32.totalorder %s16, 0
    %p121 = por %p119, %p120
    %p122 = scmp.ne.s32.totalorder %s110, %s111
    %p123 = scmp.eq.s32.totalorder %s17, 1
    %p124 = por %p122, %p123
    %p126 = scmp.ne.s32.totalorder %s111, %s125
    %p127 = scmp.eq.s32.totalorder %s17, 0
    %p128 = por %p126, %p127
    %s129 = ssub.s32 %s11, %s18
    %p130 = scmp.eq.s32.totalorder %s129, 0
    %s132 = sadd.s32 %s131, 1
    %s133 = scalar_select %p130, %s131, %s132
    %p136 = pneg %p130
    %p137 = scmp.eq.s32.totalorder %s11, 1
    %p138 = por %p136, %p137
    %p139 = scmp.ne.s32.totalorder %s131, %s134
    %p140 = scmp.eq.s32.totalorder %s11, 0
    %p141 = por %p139, %p140
    %p142 = scmp.ne.s32.totalorder %s131, %s134
    %p143 = scmp.eq.s32.totalorder %s16, 1
    %p144 = por %p142, %p143
    %p145 = scmp.ne.s32.totalorder %s134, %s135
    %p146 = scmp.eq.s32.totalorder %s16, 0
    %p147 = por %p145, %p146
    %p148 = scmp.ne.s32.totalorder %s134, %s135
    %p149 = scmp.eq.s32.totalorder %s17, 1
    %p150 = por %p148, %p149
    %p152 = scmp.ne.s32.totalorder %s135, %s151
    %p153 = scmp.eq.s32.totalorder %s17, 0
    %p154 = por %p152, %p153
    %p155 = scmp.le.s32.totalorder 1, %s11
    %p156 = scmp.lt.s32.totalorder %s11, 3
    %p157 = pnand %p155, %p156
    %p158 = pneg %p157
    // Predicated region
    $region9: #{baseline_forward.1} parent=5 // pred_check
      _
    $region10: #{baseline_forward.1} parent=5 // pred_check_branch
      %160 = sbr.rel (%p157) target = $region12
    $region11: #{baseline_forward.1} parent=5 // pred_region
      %s161 = ssub.s32 %s11, 1
      // Predicated region
      $region13: #{baseline_forward.1} parent=11 // pred_check
        %p162 = pneg %p58
      $region14: #{baseline_forward.1} parent=11 // pred_check_branch
        %164 = sbr.rel (%p162) target = $region16
      $region15: #{baseline_forward.1} parent=11 // pred_region
        _
      $region16: #{baseline_forward.1} parent=11 // pred_fallthru
        _
      // Predicated region
      $region17: #{baseline_forward.1} parent=11 // pred_check
        %p165 = pneg %p79
      $region18: #{baseline_forward.1} parent=11 // pred_check_branch
        %167 = sbr.rel (%p165) target = $region20
      $region19: #{baseline_forward.1} parent=11 // pred_region
        _
      $region20: #{baseline_forward.1} parent=11 // pred_fallthru
        _
      // Predicated region
      $region21: #{baseline_forward.1} parent=11 // pred_check
        %p168 = pneg %p100
      $region22: #{baseline_forward.1} parent=11 // pred_check_branch
        %170 = sbr.rel (%p168) target = $region24
      $region23: #{baseline_forward.1} parent=11 // pred_region
        _
      $region24: #{baseline_forward.1} parent=11 // pred_fallthru
        _
      // Predicated region
      $region25: #{baseline_forward.1} parent=11 // pred_check
        %p171 = pneg %p121
      $region26: #{baseline_forward.1} parent=11 // pred_check_branch
        %173 = sbr.rel (%p171) target = $region28
      $region27: #{baseline_forward.1} parent=11 // pred_region
        _
      $region28: #{baseline_forward.1} parent=11 // pred_fallthru
        _
    $region12: #{baseline_forward.1} parent=5 // pred_fallthru
      _
    %p174 = scmp.lt.s32.totalorder %s11, 2
    // Predicated region
    $region29: #{baseline_forward.1} parent=5 // pred_check
      %p175 = pneg %p174
    $region30: #{baseline_forward.1} parent=5 // pred_check_branch
      %177 = sbr.rel (%p175) target = $region32
    $region31: #{baseline_forward.1} parent=5 // pred_region
      // Predicated region
      $region33: #{baseline_forward.1} parent=31 // pred_check
        %p178 = pneg %p31
      $region34: #{baseline_forward.1} parent=31 // pred_check_branch
        %180 = sbr.rel (%p178) target = $region36
      $region35: #{baseline_forward.1} parent=31 // pred_region
        %p181 = scmp.lt.s32.totalorder %s11, 1
        %s182 = scalar_select %p181, %s11, 1
        %s183 = smul.addr %s182, 8
        %s184 = smul.addr %s183, 8
        %s185 = scalar_lea.vmem %s0, %s184
      $region36: #{baseline_forward.1} parent=31 // pred_fallthru
        _
    $region32: #{baseline_forward.1} parent=5 // pred_fallthru
      _
    %p186 = scmp.le.s32.totalorder 1, %s11
    %p187 = scmp.lt.s32.totalorder %s11, 3
    %p188 = pnand %p186, %p187
    %p189 = pneg %p188
    // Predicated region
    $region37: #{baseline_forward.1} parent=5 // pred_check
      _
    $region38: #{baseline_forward.1} parent=5 // pred_check_branch
      %191 = sbr.rel (%p188) target = $region40
    $region39: #{baseline_forward.1} parent=5 // pred_region
      %s192 = ssub.s32 %s11, 1
      %p193 = scmp.lt.s32.totalorder %s16, 1
      %s194 = scalar_select %p193, %s16, 1
      %s195 = smul.addr %s194, 8
      %s196 = smul.addr %s195, 8
      %s197 = scalar_lea.vmem %s0, %s196
      %p198 = pneg %p37
      %p199 = pneg %p34
      %p200 = pneg %p58
      %p201 = pneg %p55
      %p202 = pneg %p79
      %p203 = pneg %p76
      %p204 = pneg %p100
      %p205 = pneg %p97
      %p206 = pneg %p121
      %p207 = pneg %p118
      %p208 = pneg %p147
      %p209 = pneg %p144
      %p210 = scmp.lt.s32.totalorder %s16, 1
      %s211 = scalar_select %p210, %s16, 1
      %s212 = smul.addr %s211, 4
      %s213 = scalar_lea.vmem %s5, %s212
      %p214 = scmp.lt.s32.totalorder %s16, 1
      %s215 = scalar_select %p214, %s16, 1
      %s216 = smul.addr %s215, 8
      %s217 = smul.addr %s216, 8
      %s218 = scalar_lea.vmem %s0, %s217
      %p219 = scmp.lt.s32.totalorder %s16, 1
      %s220 = scalar_select %p219, %s16, 1
      %s221 = smul.addr %s220, 4
      %s222 = scalar_lea.vmem %s5, %s221
      %v223 = vld [vmem:[%s218] sm:$0xff]
      %v224 = vld [vmem:[%s218 + $0x8] sm:$0xff]
      %v225 = vld [vmem:[%s218 + $0x10] sm:$0xff]
      %v226 = vld [vmem:[%s218 + $0x18] sm:$0xff]
      %v227 = vld [vmem:[%s218 + $0x20] sm:$0xff]
      %v228 = vld [vmem:[%s218 + $0x28] sm:$0xff]
      %v229 = vld [vmem:[%s218 + $0x30] sm:$0xff]
      %v230 = vld [vmem:[%s218 + $0x38] sm:$0xff]
      %v231 = vld [vmem:[%s1] sm:$0xff]
      %v232 = vld [vmem:[%s1 + $0x8] sm:$0xff]
      %v233 = vld [vmem:[%s1 + $0x10] sm:$0xff]
      %v234 = vld [vmem:[%s1 + $0x18] sm:$0xff]
      %v235 = vld [vmem:[%s2] sm:$0xf]
      %v237 = vperm.slane %v235, 0
      %v238 = vperm.slane %v235, 1
      %v239 = vperm.slane %v235, 2
      %v240 = vperm.slane %v235, 3
      %vm245 = vcmask 64512
      %v247 = vsel %vm245, %v223, 0
      %v250 = vsel %vm245, %v224, 0
      %v253 = vsel %vm245, %v225, 0
      %v256 = vsel %vm245, %v226, 0
      %v259 = vsel %vm245, %v227, 0
      %v262 = vsel %vm245, %v228, 0
      %v265 = vsel %vm245, %v229, 0
      %v268 = vsel %vm245, %v230, 0
      %270 = vmatpush.msra.mxu0 0.0
      %271 = vmatpush.msra.mxu0 0.0
      %272 = vmatpush.msra.mxu0 0.0
      %273 = vmatpush.msra.mxu0 0.0
      %274 = vmatpush.msra.mxu0 0.0
      %275 = vmatpush.msra.mxu0 0.0
      %276 = vmatpush.msra.mxu0 0.0
      %277 = vmatpush.msra.mxu0 0.0
      %278 = vmatpush.msra.mxu0 0.0
      %279 = vmatpush.msra.mxu0 0.0
      %280 = vmatpush.msra.mxu0 0.0
      %281 = vmatpush.msra.mxu0 0.0
      %282 = vmatpush.msra.mxu0 0.0
      %283 = vmatpush.msra.mxu0 0.0
      %284 = vmatpush.msra.mxu0 0.0
      %285 = vmatpush.msra.mxu0 %v231
      %286 = vmatmul.f32.gmra.mxu0 %v247
      %v287 = vpop.f32.mrf.mxu0
      %v288 = vadd.f32 %v237, %v287
      %289 = vmatmul.f32.gmra.mxu0 %v250
      %v290 = vpop.f32.mrf.mxu0
      %v291 = vadd.f32 %v237, %v290
      %292 = vmatmul.f32.gmra.mxu0 %v253
      %v293 = vpop.f32.mrf.mxu0
      %v294 = vadd.f32 %v237, %v293
      %295 = vmatmul.f32.gmra.mxu0 %v256
      %v296 = vpop.f32.mrf.mxu0
      %v297 = vadd.f32 %v237, %v296
      %298 = vmatmul.f32.gmra.mxu0 %v259
      %v299 = vpop.f32.mrf.mxu0
      %v300 = vadd.f32 %v237, %v299
      %301 = vmatmul.f32.gmra.mxu0 %v262
      %v302 = vpop.f32.mrf.mxu0
      %v303 = vadd.f32 %v237, %v302
      %304 = vmatmul.f32.gmra.mxu0 %v265
      %v305 = vpop.f32.mrf.mxu0
      %v306 = vadd.f32 %v237, %v305
      %307 = vmatmul.f32.gmra.mxu0 %v268
      %v308 = vpop.f32.mrf.mxu0
      %v309 = vadd.f32 %v237, %v308
      %310 = vdwg.mxu0
      %311 = vmatpush.msra.mxu0 0.0
      %312 = vmatpush.msra.mxu0 0.0
      %313 = vmatpush.msra.mxu0 0.0
      %314 = vmatpush.msra.mxu0 0.0
      %315 = vmatpush.msra.mxu0 0.0
      %316 = vmatpush.msra.mxu0 0.0
      %317 = vmatpush.msra.mxu0 0.0
      %318 = vmatpush.msra.mxu0 0.0
      %319 = vmatpush.msra.mxu0 0.0
      %320 = vmatpush.msra.mxu0 0.0
      %321 = vmatpush.msra.mxu0 0.0
      %322 = vmatpush.msra.mxu0 0.0
      %323 = vmatpush.msra.mxu0 0.0
      %324 = vmatpush.msra.mxu0 0.0
      %325 = vmatpush.msra.mxu0 0.0
      %326 = vmatpush.msra.mxu0 %v232
      %327 = vmatmul.f32.gmra.mxu0 %v247
      %v328 = vpop.f32.mrf.mxu0
      %v329 = vadd.f32 %v238, %v328
      %330 = vmatmul.f32.gmra.mxu0 %v250
      %v331 = vpop.f32.mrf.mxu0
      %v332 = vadd.f32 %v238, %v331
      %333 = vmatmul.f32.gmra.mxu0 %v253
      %v334 = vpop.f32.mrf.mxu0
      %v335 = vadd.f32 %v238, %v334
      %336 = vmatmul.f32.gmra.mxu0 %v256
      %v337 = vpop.f32.mrf.mxu0
      %v338 = vadd.f32 %v238, %v337
      %339 = vmatmul.f32.gmra.mxu0 %v259
      %v340 = vpop.f32.mrf.mxu0
      %v341 = vadd.f32 %v238, %v340
      %342 = vmatmul.f32.gmra.mxu0 %v262
      %v343 = vpop.f32.mrf.mxu0
      %v344 = vadd.f32 %v238, %v343
      %345 = vmatmul.f32.gmra.mxu0 %v265
      %v346 = vpop.f32.mrf.mxu0
      %v347 = vadd.f32 %v238, %v346
      %348 = vmatmul.f32.gmra.mxu0 %v268
      %v349 = vpop.f32.mrf.mxu0
      %v350 = vadd.f32 %v238, %v349
      %351 = vdwg.mxu0
      %352 = vmatpush.msra.mxu0 0.0
      %353 = vmatpush.msra.mxu0 0.0
      %354 = vmatpush.msra.mxu0 0.0
      %355 = vmatpush.msra.mxu0 0.0
      %356 = vmatpush.msra.mxu0 0.0
      %357 = vmatpush.msra.mxu0 0.0
      %358 = vmatpush.msra.mxu0 0.0
      %359 = vmatpush.msra.mxu0 0.0
      %360 = vmatpush.msra.mxu0 0.0
      %361 = vmatpush.msra.mxu0 0.0
      %362 = vmatpush.msra.mxu0 0.0
      %363 = vmatpush.msra.mxu0 0.0
      %364 = vmatpush.msra.mxu0 0.0
      %365 = vmatpush.msra.mxu0 0.0
      %366 = vmatpush.msra.mxu0 0.0
      %367 = vmatpush.msra.mxu0 %v233
      %368 = vmatmul.f32.gmra.mxu0 %v247
      %v369 = vpop.f32.mrf.mxu0
      %v370 = vadd.f32 %v239, %v369
      %371 = vmatmul.f32.gmra.mxu0 %v250
      %v372 = vpop.f32.mrf.mxu0
      %v373 = vadd.f32 %v239, %v372
      %374 = vmatmul.f32.gmra.mxu0 %v253
      %v375 = vpop.f32.mrf.mxu0
      %v376 = vadd.f32 %v239, %v375
      %377 = vmatmul.f32.gmra.mxu0 %v256
      %v378 = vpop.f32.mrf.mxu0
      %v379 = vadd.f32 %v239, %v378
      %380 = vmatmul.f32.gmra.mxu0 %v259
      %v381 = vpop.f32.mrf.mxu0
      %v382 = vadd.f32 %v239, %v381
      %383 = vmatmul.f32.gmra.mxu0 %v262
      %v384 = vpop.f32.mrf.mxu0
      %v385 = vadd.f32 %v239, %v384
      %386 = vmatmul.f32.gmra.mxu0 %v265
      %v387 = vpop.f32.mrf.mxu0
      %v388 = vadd.f32 %v239, %v387
      %389 = vmatmul.f32.gmra.mxu0 %v268
      %v390 = vpop.f32.mrf.mxu0
      %v391 = vadd.f32 %v239, %v390
      %392 = vdwg.mxu0
      %393 = vmatpush.msra.mxu0 0.0
      %394 = vmatpush.msra.mxu0 0.0
      %395 = vmatpush.msra.mxu0 0.0
      %396 = vmatpush.msra.mxu0 0.0
      %397 = vmatpush.msra.mxu0 0.0
      %398 = vmatpush.msra.mxu0 0.0
      %399 = vmatpush.msra.mxu0 0.0
      %400 = vmatpush.msra.mxu0 0.0
      %401 = vmatpush.msra.mxu0 0.0
      %402 = vmatpush.msra.mxu0 0.0
      %403 = vmatpush.msra.mxu0 0.0
      %404 = vmatpush.msra.mxu0 0.0
      %405 = vmatpush.msra.mxu0 0.0
      %406 = vmatpush.msra.mxu0 0.0
      %407 = vmatpush.msra.mxu0 0.0
      %408 = vmatpush.msra.mxu0 %v234
      %409 = vmatmul.f32.gmra.mxu0 %v247
      %v410 = vpop.f32.mrf.mxu0
      %v411 = vadd.f32 %v240, %v410
      %412 = vmatmul.f32.gmra.mxu0 %v250
      %v413 = vpop.f32.mrf.mxu0
      %v414 = vadd.f32 %v240, %v413
      %415 = vmatmul.f32.gmra.mxu0 %v253
      %v416 = vpop.f32.mrf.mxu0
      %v417 = vadd.f32 %v240, %v416
      %418 = vmatmul.f32.gmra.mxu0 %v256
      %v419 = vpop.f32.mrf.mxu0
      %v420 = vadd.f32 %v240, %v419
      %421 = vmatmul.f32.gmra.mxu0 %v259
      %v422 = vpop.f32.mrf.mxu0
      %v423 = vadd.f32 %v240, %v422
      %424 = vmatmul.f32.gmra.mxu0 %v262
      %v425 = vpop.f32.mrf.mxu0
      %v426 = vadd.f32 %v240, %v425
      %427 = vmatmul.f32.gmra.mxu0 %v265
      %v428 = vpop.f32.mrf.mxu0
      %v429 = vadd.f32 %v240, %v428
      %430 = vmatmul.f32.gmra.mxu0 %v268
      %v431 = vpop.f32.mrf.mxu0
      %v432 = vadd.f32 %v240, %v431
      %433 = vdwg.mxu0
      %v434 = vmax.f32 %v288, 0.0
      %v435 = vmax.f32 %v329, 0.0
      %v436 = vmax.f32 %v370, 0.0
      %v437 = vmax.f32 %v411, 0.0
      %v438 = vmax.f32 %v291, 0.0
      %v439 = vmax.f32 %v332, 0.0
      %v440 = vmax.f32 %v373, 0.0
      %v441 = vmax.f32 %v414, 0.0
      %v442 = vmax.f32 %v294, 0.0
      %v443 = vmax.f32 %v335, 0.0
      %v444 = vmax.f32 %v376, 0.0
      %v445 = vmax.f32 %v417, 0.0
      %v446 = vmax.f32 %v297, 0.0
      %v447 = vmax.f32 %v338, 0.0
      %v448 = vmax.f32 %v379, 0.0
      %v449 = vmax.f32 %v420, 0.0
      %v450 = vmax.f32 %v300, 0.0
      %v451 = vmax.f32 %v341, 0.0
      %v452 = vmax.f32 %v382, 0.0
      %v453 = vmax.f32 %v423, 0.0
      %v454 = vmax.f32 %v303, 0.0
      %v455 = vmax.f32 %v344, 0.0
      %v456 = vmax.f32 %v385, 0.0
      %v457 = vmax.f32 %v426, 0.0
      %v458 = vmax.f32 %v306, 0.0
      %v459 = vmax.f32 %v347, 0.0
      %v460 = vmax.f32 %v388, 0.0
      %v461 = vmax.f32 %v429, 0.0
      %v462 = vmax.f32 %v309, 0.0
      %v463 = vmax.f32 %v350, 0.0
      %v464 = vmax.f32 %v391, 0.0
      %v465 = vmax.f32 %v432, 0.0
      %v466 = vadd.f32 %v434, %v438
      %v467 = vadd.f32 %v466, %v442
      %v468 = vadd.f32 %v467, %v446
      %v469 = vadd.f32 %v468, %v450
      %v470 = vadd.f32 %v469, %v454
      %v471 = vadd.f32 %v470, %v458
      %v472 = vadd.f32 %v471, %v462
      %v473 = vrot.slane %v472, 4
      %v474 = vadd.f32 %v472, %v473
      %v475 = vrot.slane %v474, 2
      %v476 = vadd.f32 %v474, %v475
      %v477 = vrot.slane %v476, 1
      %v478 = vadd.f32 %v476, %v477
      %v479 = vadd.f32 %v435, %v439
      %v480 = vadd.f32 %v479, %v443
      %v481 = vadd.f32 %v480, %v447
      %v482 = vadd.f32 %v481, %v451
      %v483 = vadd.f32 %v482, %v455
      %v484 = vadd.f32 %v483, %v459
      %v485 = vadd.f32 %v484, %v463
      %v486 = vrot.slane %v485, 4
      %v487 = vadd.f32 %v485, %v486
      %v488 = vrot.slane %v487, 2
      %v489 = vadd.f32 %v487, %v488
      %v490 = vrot.slane %v489, 1
      %v491 = vadd.f32 %v489, %v490
      %v492 = vadd.f32 %v436, %v440
      %v493 = vadd.f32 %v492, %v444
      %v494 = vadd.f32 %v493, %v448
      %v495 = vadd.f32 %v494, %v452
      %v496 = vadd.f32 %v495, %v456
      %v497 = vadd.f32 %v496, %v460
      %v498 = vadd.f32 %v497, %v464
      %v499 = vrot.slane %v498, 4
      %v500 = vadd.f32 %v498, %v499
      %v501 = vrot.slane %v500, 2
      %v502 = vadd.f32 %v500, %v501
      %v503 = vrot.slane %v502, 1
      %v504 = vadd.f32 %v502, %v503
      %v505 = vadd.f32 %v437, %v441
      %v506 = vadd.f32 %v505, %v445
      %v507 = vadd.f32 %v506, %v449
      %v508 = vadd.f32 %v507, %v453
      %v509 = vadd.f32 %v508, %v457
      %v510 = vadd.f32 %v509, %v461
      %v511 = vadd.f32 %v510, %v465
      %v512 = vrot.slane %v511, 4
      %v513 = vadd.f32 %v511, %v512
      %v514 = vrot.slane %v513, 2
      %v515 = vadd.f32 %v513, %v514
      %v516 = vrot.slane %v515, 1
      %v517 = vadd.f32 %v515, %v516
      %v518 = vrcp.pop 64.0
      %v519 = vmul.f32 64.0, %v518
      %v520 = vsub.f32 1.0, %v519
      %v521 = vmul.f32 %v518, %v520
      %v522 = vadd.f32 %v518, %v521
      %vm523 = vweird.f32 %v518
      %v524 = vsel %vm523, %v518, %v522
      %v525 = vmul.f32 %v478, %v524
      %v526 = vmul.f32 %v491, %v524
      %v527 = vmul.f32 %v504, %v524
      %v528 = vmul.f32 %v517, %v524
      %v529 = vmax.f32 %v434, %v438
      %v530 = vmax.f32 %v529, %v442
      %v531 = vmax.f32 %v530, %v446
      %v532 = vmax.f32 %v531, %v450
      %v533 = vmax.f32 %v532, %v454
      %v534 = vmax.f32 %v533, %v458
      %v535 = vmax.f32 %v534, %v462
      %v536 = vrot.slane %v535, 4
      %v537 = vmax.f32 %v535, %v536
      %v538 = vrot.slane %v537, 2
      %v539 = vmax.f32 %v537, %v538
      %v540 = vrot.slane %v539, 1
      %v541 = vmax.f32 %v539, %v540
      %v542 = vmax.f32 %v435, %v439
      %v543 = vmax.f32 %v542, %v443
      %v544 = vmax.f32 %v543, %v447
      %v545 = vmax.f32 %v544, %v451
      %v546 = vmax.f32 %v545, %v455
      %v547 = vmax.f32 %v546, %v459
      %v548 = vmax.f32 %v547, %v463
      %v549 = vrot.slane %v548, 4
      %v550 = vmax.f32 %v548, %v549
      %v551 = vrot.slane %v550, 2
      %v552 = vmax.f32 %v550, %v551
      %v553 = vrot.slane %v552, 1
      %v554 = vmax.f32 %v552, %v553
      %v555 = vmax.f32 %v436, %v440
      %v556 = vmax.f32 %v555, %v444
      %v557 = vmax.f32 %v556, %v448
      %v558 = vmax.f32 %v557, %v452
      %v559 = vmax.f32 %v558, %v456
      %v560 = vmax.f32 %v559, %v460
      %v561 = vmax.f32 %v560, %v464
      %v562 = vrot.slane %v561, 4
      %v563 = vmax.f32 %v561, %v562
      %v564 = vrot.slane %v563, 2
      %v565 = vmax.f32 %v563, %v564
      %v566 = vrot.slane %v565, 1
      %v567 = vmax.f32 %v565, %v566
      %v568 = vmax.f32 %v437, %v441
      %v569 = vmax.f32 %v568, %v445
      %v570 = vmax.f32 %v569, %v449
      %v571 = vmax.f32 %v570, %v453
      %v572 = vmax.f32 %v571, %v457
      %v573 = vmax.f32 %v572, %v461
      %v574 = vmax.f32 %v573, %v465
      %v575 = vrot.slane %v574, 4
      %v576 = vmax.f32 %v574, %v575
      %v577 = vrot.slane %v576, 2
      %v578 = vmax.f32 %v576, %v577
      %v579 = vrot.slane %v578, 1
      %v580 = vmax.f32 %v578, %v579
      %v581 = vadd.f32 %v525, %v541
      %v582 = vadd.f32 %v526, %v554
      %v583 = vadd.f32 %v527, %v567
      %v584 = vadd.f32 %v528, %v580
      %v585 = vld [vmem:[%s3] sm:$0xf]
      %v587 = vperm.slane %v585, 0
      %v588 = vperm.slane %v585, 1
      %v589 = vperm.slane %v585, 2
      %v590 = vperm.slane %v585, 3
      %v595 = vmul.f32 %v581, %v587
      %v596 = vmul.f32 %v582, %v588
      %v597 = vmul.f32 %v583, %v589
      %v598 = vmul.f32 %v584, %v590
      %v599 = vld [vmem:[%s4] sm:$0xf]
      %v601 = vperm.slane %v599, 0
      %v602 = vperm.slane %v599, 1
      %v603 = vperm.slane %v599, 2
      %v604 = vperm.slane %v599, 3
      %v609 = vadd.f32 %v595, %v601
      %v610 = vadd.f32 %v596, %v602
      %v611 = vadd.f32 %v597, %v603
      %v612 = vadd.f32 %v598, %v604
      %v617 = vrot.slane %v610, 7
      %v618 = vrot.slane %v611, 6
      %v619 = vrot.slane %v612, 5
      %vm620 = vcmask 1040384
      %v621 = vsel %vm620, %v609, %v617
      %vm622 = vcmask 1042434
      %v623 = vsel %vm622, %v618, %v619
      %vm624 = vcmask 1041408
      %v625 = vsel %vm624, %v621, %v623
      %v627 = vlaneseq
      %vm628 = vcmp.ge.s32.totalorder %v627, 0
      %vm629 = vcmp.lt.s32.totalorder %v627, 512
      %vm630 = vmand %vm628, %vm629
      %631 = vst.msk [vmem:[%s222] sm:$0xf] %vm630, %v625
      %p632 = scmp.lt.s32.totalorder %s16, 1
      %s633 = scalar_select %p632, %s16, 1
      %s634 = smul.addr %s633, 4
      %s635 = scalar_lea.vmem %s5, %s634
      // Predicated region
      $region41: #{baseline_forward.1} parent=39 // pred_check
        %p636 = pneg %p144
      $region42: #{baseline_forward.1} parent=39 // pred_check_branch
        %638 = sbr.rel (%p636) target = $region44
      $region43: #{baseline_forward.1} parent=39 // pred_region
        _
      $region44: #{baseline_forward.1} parent=39 // pred_fallthru
        _
    $region40: #{baseline_forward.1} parent=5 // pred_fallthru
      _
    %p639 = scmp.le.s32.totalorder 2, %s11
    // Predicated region
    $region45: #{baseline_forward.1} parent=5 // pred_check
      %p640 = pneg %p639
    $region46: #{baseline_forward.1} parent=5 // pred_check_branch
      %642 = sbr.rel (%p640) target = $region48
    $region47: #{baseline_forward.1} parent=5 // pred_region
      %s643 = ssub.s32 %s11, 2
      // Predicated region
      $region49: #{baseline_forward.1} parent=47 // pred_check
        %p644 = pneg %p150
      $region50: #{baseline_forward.1} parent=47 // pred_check_branch
        %646 = sbr.rel (%p644) target = $region52
      $region51: #{baseline_forward.1} parent=47 // pred_region
        %p647 = scmp.lt.s32.totalorder %s17, 1
        %s648 = scalar_select %p647, %s17, 1
        %s649 = smul.addr %s648, 4
        %s650 = scalar_lea.vmem %s5, %s649
      $region52: #{baseline_forward.1} parent=47 // pred_fallthru
        _
    $region48: #{baseline_forward.1} parent=5 // pred_fallthru
      _
  $region6: #{baseline_forward.1} parent=0 // loop_footer
    %s15 = sadd.s32 1, %s11
  $region7: #{baseline_forward.1} parent=0 // loop_footer_branch
    %10 = sbr.rel target = $region3
  $region8: #{baseline_forward.1} parent=0 // loop_exit
    _

</llo_original>
